<compile_context>
chip_gen: v6e
topology: v6e:2x2x1
jax: 0.10.0
libtpu: 0.0.40
codegen_flags: <defaults>
</compile_context>

<pallas_src>
import functools

import jax
import jax.numpy as jnp
from jax.experimental import pallas as pl
from jax.experimental.pallas import tpu as pltpu

PAD = 128  # lane width every layer dimension is padded to


def mlp_softmax_kernel(x_ref, w_ref, b_ref, out_ref, *,
                       num_layers, pad, in_f, out_dim, act_dtype):
    """One batch tile of the RNN2 forward pass.

    x_ref   : (tile_b, in_f)         f32   activation tile (streams)
    w_ref   : (num_layers*pad, pad)  bf16  packed weight slab (VMEM-resident)
    b_ref   : (num_layers, pad)      f32   packed bias slab   (VMEM-resident)
    out_ref : (tile_b, out_dim)      f32   softmax probabilities
    """
    mm_dtype = w_ref.dtype
    h = x_ref[...]          # f32 (tile_b, in_f)
    k_rows = in_f           # valid contraction length for the current layer

    # Static Python loop -> fully unrolled 5-layer chain.
    for layer in range(num_layers):
        w = w_ref[pl.ds(layer * pad, k_rows), :]   # (k_rows, pad) bf16, static slice
        b = b_ref[pl.ds(layer, 1), :]              # (1, pad) f32, broadcasts over rows
        # MXU: bf16 x bf16 -> f32 accumulation.
        y = jnp.dot(h.astype(mm_dtype), w, preferred_element_type=jnp.float32) + b
        if layer < num_layers - 1:
            # bf16 tanh on v6e/v7x feeds the next dot with no extra cast;
            # f32 tanh on v5e (no bf16 VPU/EUP there).
            h = jnp.tanh(y.astype(act_dtype))
        else:
            h = y                                   # logits stay f32
        k_rows = pad

    # Numerically-stable softmax.  Padded logit lanes already hold -1e30 (baked
    # into the last layer's packed bias), so exp() is exactly 0 there and the
    # full-lane max/sum are correct with no extra masking ops.
    m = jnp.max(h, axis=-1, keepdims=True)
    e = jnp.exp(h - m)
    denom = jnp.sum(e, axis=-1, keepdims=True)
    out_ref[...] = (e[:, :out_dim] / denom).astype(out_ref.dtype)   # exact divide


def pack_params(params, pad=PAD, matmul_dtype=jnp.bfloat16, neg_fill=-1e30):
    """Zero-pad every layer to (pad, pad)/(pad,), pack into two slabs.

    The last layer's padded bias lanes are set to `neg_fill` so the softmax
    mask is free inside the kernel.  Call ONCE and reuse the slabs.
    """
    num_layers = len(params)
    w_blocks, b_rows = [], []
    for li, (w, b) in enumerate(params):
        in_f, out_f = w.shape
        w_p = jnp.zeros((pad, pad), jnp.float32).at[:in_f, :out_f].set(w)
        if li == num_layers - 1:
            b_p = jnp.full((pad,), neg_fill, jnp.float32).at[:out_f].set(b)
        else:
            b_p = jnp.zeros((pad,), jnp.float32).at[:out_f].set(b)
        w_blocks.append(w_p)
        b_rows.append(b_p)
    w_slab = jnp.concatenate(w_blocks, axis=0).astype(matmul_dtype)  # (L*pad, pad)
    b_slab = jnp.stack(b_rows, axis=0)                               # (L, pad) f32
    return w_slab, b_slab


def _round_up(v, m):
    return ((v + m - 1) // m) * m


def _pick_tile_b(batch):
    """Big tiles amortize per-grid-step overhead; >=2 tiles feed both v7x TCs."""
    if batch <= 256:
        return max(8, _round_up(batch, 8))            # single tile: latency path
    if batch <= 1024:
        return _round_up((batch + 1) // 2, 8)         # exactly 2 parallel tiles
    return 512                                        # large batch: 512-row tiles


def default_act_dtype():
    """bf16 tanh/activations on v6e/v7x (bf16 VPU/EUP); f32 elsewhere (v5e)."""
    try:
        kind = jax.devices()[0].device_kind.lower()
    except Exception:
        return jnp.float32
    return jnp.bfloat16 if ("v6" in kind or "v7" in kind) else jnp.float32


def rnn2_forward(x, w_slab, b_slab, *, num_layers, in_f, out_dim,
                 pad=PAD, tile_b=None, act_dtype=jnp.float32):
    """x: (batch, in_f) f32.  w_slab/b_slab: output of pack_params (prepacked)."""
    batch = x.shape[0]
    if tile_b is None:
        tile_b = _pick_tile_b(batch)
    padded_batch = _round_up(batch, tile_b)
    num_tiles = padded_batch // tile_b

    x = x.astype(jnp.float32)
    if padded_batch != batch:
        # Only the batch dim is padded; lanes stay at natural width in_f.
        x = jnp.zeros((padded_batch, in_f), jnp.float32).at[:batch].set(x)

    # Triple-buffer the streamed x tile only when tiles are small & numerous
    # (short per-tile compute could otherwise expose the DMA issue latency).
    if tile_b <= 128 and num_tiles >= 3:
        x_spec = pl.BlockSpec((tile_b, in_f), lambda i: (i, 0),
                              pipeline_mode=pl.Buffered(3))
    else:
        x_spec = pl.BlockSpec((tile_b, in_f), lambda i: (i, 0))

    kernel = functools.partial(
        mlp_softmax_kernel, num_layers=num_layers, pad=pad,
        in_f=in_f, out_dim=out_dim, act_dtype=act_dtype)

    # Advisory cost estimate so XLA can overlap this small call with other HLO.
    flops = int(2 * padded_batch * (in_f * pad + (num_layers - 1) * pad * pad))
    transcendentals = int(padded_batch * pad * num_layers)  # 4x tanh + 1x exp
    bytes_accessed = int(
        padded_batch * in_f * 4 + w_slab.size * w_slab.dtype.itemsize
        + b_slab.size * 4 + padded_batch * out_dim * 4)

    out_p = pl.pallas_call(
        kernel,
        out_shape=jax.ShapeDtypeStruct((padded_batch, out_dim), jnp.float32),
        grid_spec=pltpu.PrefetchScalarGridSpec(
            num_scalar_prefetch=0,
            grid=(num_tiles,),
            in_specs=[
                x_spec,                                                   # x: streams
                pl.BlockSpec((num_layers * pad, pad), lambda i: (0, 0)),  # weights: resident
                pl.BlockSpec((num_layers, pad), lambda i: (0, 0)),        # biases: resident
            ],
            out_specs=pl.BlockSpec((tile_b, out_dim), lambda i: (i, 0)),
        ),
        compiler_params=pltpu.CompilerParams(
            dimension_semantics=("parallel",)),  # batch tiles shard across TCs on v7x
        cost_estimate=pl.CostEstimate(
            flops=flops, transcendentals=transcendentals,
            bytes_accessed=bytes_accessed),
    )(x, w_slab, b_slab)

    return out_p if padded_batch == batch else out_p[:batch]


def init_linear(key, in_f, out_f):
    """Deterministic init mimicking PyTorch nn.Linear default (uniform +-1/sqrt(in))."""
    kw, kb = jax.random.split(key)
    bound = 1.0 / jnp.sqrt(jnp.float32(in_f))
    w = jax.random.uniform(kw, (in_f, out_f), jnp.float32, -bound, bound)
    b = jax.random.uniform(kb, (out_f,), jnp.float32, -bound, bound)
    return w, b


if __name__ == "__main__":
    # Module sizes: input_size, hidden1..4, output_size
    input_size, h1, h2, h3, h4, output_size = 32, 64, 64, 48, 64, 16
    batch = 8

    key = jax.random.PRNGKey(0)
    k_x, k1, k2, k3, k4, k5, k_sm = jax.random.split(key, 7)

    params = [
        init_linear(k1, input_size, h1),
        init_linear(k2, h1, h2),
        init_linear(k3, h2, h3),
        init_linear(k4, h3, h4),
        init_linear(k5, h4, output_size),
    ]
    # NOTE: the PyTorch module also defines self.softmax = nn.Linear(output, output)
    # but never uses it in forward(); created here for parity and ignored.
    _unused_softmax_linear = init_linear(k_sm, output_size, output_size)

    # Pack ONCE (hoisted out of the per-call path) and reuse the slabs.
    w_slab, b_slab = pack_params(params)

    fwd = jax.jit(functools.partial(
        rnn2_forward, num_layers=len(params), in_f=input_size,
        out_dim=output_size, act_dtype=default_act_dtype()))

    x = jax.random.normal(k_x, (batch, input_size), jnp.float32)
    out = jax.block_until_ready(fwd(x, w_slab, b_slab))

    # Sanity: shape + softmax rows sum to 1 (exact divide -> f32-tight).
    assert out.shape == (batch, output_size)
    assert jnp.allclose(jnp.sum(out, axis=-1), 1.0, atol=1e-4), "softmax rows != 1"

    # Pure-JAX f32 reference (kernel uses bf16 MXU operands -> loose tolerance).
    ref = x
    for w, b in params[:-1]:
        ref = jnp.tanh(ref @ w + b)
    w5, b5 = params[-1]
    ref = jax.nn.softmax(ref @ w5 + b5, axis=-1)
    assert jnp.allclose(out, ref, atol=5e-2), "mismatch vs f32 reference"

    print("KERNEL_OK")
</pallas_src>

<mosaic_0001>
module attributes {stable_mosaic.version = 11 : i64} {
  func.func @mlp_softmax_kernel(%arg0: i32, %arg1: memref<8x32xf32, #tpu.memory_space<vmem>>, %arg2: memref<640x128xbf16, #tpu.memory_space<vmem>>, %arg3: memref<5x128xf32, #tpu.memory_space<vmem>>, %arg4: memref<8x16xf32, #tpu.memory_space<vmem>>) attributes {dimension_semantics = [#tpu.dimension_semantics<parallel>], iteration_bounds = array<i64: 1>, scalar_prefetch = 0 : i64, scratch_operands = 0 : i64, tpu.core_type = #tpu.core_type<tc>, window_params = [{transform_indices = @transform_0, window_bounds = array<i64: 8, 32>}, {pipeline_mode = #tpu.pipeline_mode<synchronous>, transform_indices = @transform_1, window_bounds = array<i64: 640, 128>}, {pipeline_mode = #tpu.pipeline_mode<synchronous>, transform_indices = @transform_2, window_bounds = array<i64: 5, 128>}, {transform_indices = @transform_3, window_bounds = array<i64: 8, 16>}]} {
    %c0 = arith.constant 0 : index
    %c0_0 = arith.constant 0 : index
    %0 = vector.load %arg1[%c0, %c0_0] : memref<8x32xf32, #tpu.memory_space<vmem>>, vector<8x32xf32>
    %c0_1 = arith.constant 0 : index
    %c0_2 = arith.constant 0 : index
    %1 = vector.load %arg2[%c0_1, %c0_2] : memref<640x128xbf16, #tpu.memory_space<vmem>>, vector<32x128xbf16>
    %c0_3 = arith.constant 0 : index
    %c0_4 = arith.constant 0 : index
    %2 = vector.load %arg3[%c0_3, %c0_4] : memref<5x128xf32, #tpu.memory_space<vmem>>, vector<1x128xf32>
    %3 = arith.truncf %0 : vector<8x32xf32> to vector<8x32xbf16>
    %cst = arith.constant dense<0.000000e+00> : vector<8x128xf32>
    %4 = tpu.matmul %3, %1, %cst {dimension_numbers = #tpu.dot_dimension_numbers<[1], [0], [0], [1], [0, 0, 1, 1], [], []>} : vector<8x32xbf16>, vector<32x128xbf16>, vector<8x128xf32> -> vector<8x128xf32>
    %5 = vector.broadcast %2 : vector<1x128xf32> to vector<8x128xf32>
    %6 = arith.addf %4, %5 : vector<8x128xf32>
    %7 = math.tanh %6 : vector<8x128xf32>
    %c128 = arith.constant 128 : index
    %c0_5 = arith.constant 0 : index
    %8 = vector.load %arg2[%c128, %c0_5] : memref<640x128xbf16, #tpu.memory_space<vmem>>, vector<128x128xbf16>
    %c1 = arith.constant 1 : index
    %c0_6 = arith.constant 0 : index
    %9 = vector.load %arg3[%c1, %c0_6] : memref<5x128xf32, #tpu.memory_space<vmem>>, vector<1x128xf32>
    %10 = arith.truncf %7 : vector<8x128xf32> to vector<8x128xbf16>
    %cst_7 = arith.constant dense<0.000000e+00> : vector<8x128xf32>
    %11 = tpu.matmul %10, %8, %cst_7 {dimension_numbers = #tpu.dot_dimension_numbers<[1], [0], [0], [1], [0, 0, 1, 1], [], []>} : vector<8x128xbf16>, vector<128x128xbf16>, vector<8x128xf32> -> vector<8x128xf32>
    %12 = vector.broadcast %9 : vector<1x128xf32> to vector<8x128xf32>
    %13 = arith.addf %11, %12 : vector<8x128xf32>
    %14 = math.tanh %13 : vector<8x128xf32>
    %c256 = arith.constant 256 : index
    %c0_8 = arith.constant 0 : index
    %15 = vector.load %arg2[%c256, %c0_8] : memref<640x128xbf16, #tpu.memory_space<vmem>>, vector<128x128xbf16>
    %c2 = arith.constant 2 : index
    %c0_9 = arith.constant 0 : index
    %16 = vector.load %arg3[%c2, %c0_9] : memref<5x128xf32, #tpu.memory_space<vmem>>, vector<1x128xf32>
    %17 = arith.truncf %14 : vector<8x128xf32> to vector<8x128xbf16>
    %cst_10 = arith.constant dense<0.000000e+00> : vector<8x128xf32>
    %18 = tpu.matmul %17, %15, %cst_10 {dimension_numbers = #tpu.dot_dimension_numbers<[1], [0], [0], [1], [0, 0, 1, 1], [], []>} : vector<8x128xbf16>, vector<128x128xbf16>, vector<8x128xf32> -> vector<8x128xf32>
    %19 = vector.broadcast %16 : vector<1x128xf32> to vector<8x128xf32>
    %20 = arith.addf %18, %19 : vector<8x128xf32>
    %21 = math.tanh %20 : vector<8x128xf32>
    %c384 = arith.constant 384 : index
    %c0_11 = arith.constant 0 : index
    %22 = vector.load %arg2[%c384, %c0_11] : memref<640x128xbf16, #tpu.memory_space<vmem>>, vector<128x128xbf16>
    %c3 = arith.constant 3 : index
    %c0_12 = arith.constant 0 : index
    %23 = vector.load %arg3[%c3, %c0_12] : memref<5x128xf32, #tpu.memory_space<vmem>>, vector<1x128xf32>
    %24 = arith.truncf %21 : vector<8x128xf32> to vector<8x128xbf16>
    %cst_13 = arith.constant dense<0.000000e+00> : vector<8x128xf32>
    %25 = tpu.matmul %24, %22, %cst_13 {dimension_numbers = #tpu.dot_dimension_numbers<[1], [0], [0], [1], [0, 0, 1, 1], [], []>} : vector<8x128xbf16>, vector<128x128xbf16>, vector<8x128xf32> -> vector<8x128xf32>
    %26 = vector.broadcast %23 : vector<1x128xf32> to vector<8x128xf32>
    %27 = arith.addf %25, %26 : vector<8x128xf32>
    %28 = math.tanh %27 : vector<8x128xf32>
    %c512 = arith.constant 512 : index
    %c0_14 = arith.constant 0 : index
    %29 = vector.load %arg2[%c512, %c0_14] : memref<640x128xbf16, #tpu.memory_space<vmem>>, vector<128x128xbf16>
    %c4 = arith.constant 4 : index
    %c0_15 = arith.constant 0 : index
    %30 = vector.load %arg3[%c4, %c0_15] : memref<5x128xf32, #tpu.memory_space<vmem>>, vector<1x128xf32>
    %31 = arith.truncf %28 : vector<8x128xf32> to vector<8x128xbf16>
    %cst_16 = arith.constant dense<0.000000e+00> : vector<8x128xf32>
    %32 = tpu.matmul %31, %29, %cst_16 {dimension_numbers = #tpu.dot_dimension_numbers<[1], [0], [0], [1], [0, 0, 1, 1], [], []>} : vector<8x128xbf16>, vector<128x128xbf16>, vector<8x128xf32> -> vector<8x128xf32>
    %33 = vector.broadcast %30 : vector<1x128xf32> to vector<8x128xf32>
    %34 = arith.addf %32, %33 : vector<8x128xf32>
    %cst_17 = arith.constant dense<0xFF800000> : vector<8xf32>
    %35 = vector.multi_reduction <maximumf>, %34, %cst_17 [1] : vector<8x128xf32> to vector<8xf32>
    %36 = vector.shape_cast %35 : vector<8xf32> to vector<8x1xf32>
    %37 = vector.broadcast %36 : vector<8x1xf32> to vector<8x128xf32>
    %38 = arith.subf %34, %37 : vector<8x128xf32>
    %39 = math.exp %38 : vector<8x128xf32>
    %cst_18 = arith.constant dense<0.000000e+00> : vector<8xf32>
    %40 = vector.multi_reduction <add>, %39, %cst_18 [1] : vector<8x128xf32> to vector<8xf32>
    %41 = vector.shape_cast %40 : vector<8xf32> to vector<8x1xf32>
    %42 = vector.extract_strided_slice %39 {offsets = [0, 0], sizes = [8, 16], strides = [1, 1]} : vector<8x128xf32> to vector<8x16xf32>
    %43 = vector.broadcast %41 : vector<8x1xf32> to vector<8x16xf32>
    %44 = arith.divf %42, %43 : vector<8x16xf32>
    %c0_19 = arith.constant 0 : index
    %c0_20 = arith.constant 0 : index
    %45 = vector.load %arg4[%c0_19, %c0_20] : memref<8x16xf32, #tpu.memory_space<vmem>>, vector<8x16xf32>
    tpu.vector_store %arg4[%c0_19, %c0_20], %44 {strides = array<i32>} : memref<8x16xf32, #tpu.memory_space<vmem>>, vector<8x16xf32>,
    return
  }
  func.func @transform_0(%arg0: i32) -> (i32, i32) {
    %c0_i32 = arith.constant 0 : i32
    %c0_i32_0 = arith.constant 0 : i32
    return %arg0, %c0_i32 : i32, i32
  }
  func.func @transform_1(%arg0: i32) -> (i32, i32) {
    %c0_i32 = arith.constant 0 : i32
    %c0_i32_0 = arith.constant 0 : i32
    %c0_i32_1 = arith.constant 0 : i32
    return %c0_i32, %c0_i32_0 : i32, i32
  }
  func.func @transform_2(%arg0: i32) -> (i32, i32) {
    %c0_i32 = arith.constant 0 : i32
    %c0_i32_0 = arith.constant 0 : i32
    %c0_i32_1 = arith.constant 0 : i32
    return %c0_i32, %c0_i32_0 : i32, i32
  }
  func.func @transform_3(%arg0: i32) -> (i32, i32) {
    %c0_i32 = arith.constant 0 : i32
    %c0_i32_0 = arith.constant 0 : i32
    return %arg0, %c0_i32 : i32, i32
  }
}

</mosaic_0001>

<llo_original>
// kernel: rnn2_forward.1
$region0: #{rnn2_forward.1}
  #allocation0 [shape = 'u32[]', space=smem, size = 0x4, offset = 0x4, fixed_abs, tag = 'smem constant byte address 0x4 - core index']
  #allocation1 [shape = 'u32[144,128]{1,0:T(1,128)}', space=vmem, size = 0x12000, scoped, tag = 'internal scratch']
  %s0 = inlined_call_operand.hbm [shape: f32[8,32], index: 0, kind: input, shape index: {}]
  %s1 = inlined_call_operand.hbm [shape: bf16[640,128], index: 1, kind: input, shape index: {}]
  %s2 = inlined_call_operand.hbm [shape: f32[5,128], index: 2, kind: input, shape index: {}]
  %s3 = inlined_call_operand.hbm [shape: f32[8,16], index: 3, kind: output, shape index: {}]
  %s4 = sld [smem:[#allocation0]]
  $region34: #{rnn2_forward.1} parent=0
    _
  %s6 = ssub.s32 1, %s4
  %s7 = scalar_select 0, %s6, %s4
  $region1: #{rnn2_forward.1} parent=0
    #allocation2 [shape = 'u8[4096]{0}', space=vmem, size = 0x1000, scoped, tag = 'input window, operand 0, single buffered']
    #allocation3 [shape = 's32[1]{0}', space=sflag, size = 0x4, scoped, tag = 'scoped memory for rnn2_forward.1']
    #allocation4 [shape = 's32[1]{0}', space=sflag, size = 0x4, scoped, tag = 'scoped memory for rnn2_forward.1']
    #allocation5 [shape = 'u8[163840]{0}', space=vmem, size = 0x28000, scoped, tag = 'input window, operand 1, single buffered']
    #allocation6 [shape = 's32[1]{0}', space=sflag, size = 0x4, scoped, tag = 'scoped memory for rnn2_forward.1']
    #allocation7 [shape = 'u8[4096]{0}', space=vmem, size = 0x1000, scoped, tag = 'input window, operand 2, single buffered']
    #allocation8 [shape = 'u8[4096]{0}', space=vmem, size = 0x1000, scoped, tag = 'output window, operand 0, single buffered']
    %8 = vsyncpa [#allocation3], 0
    %9 = vsyncpa [#allocation6], 0
    %10 = vsyncpa [#allocation4], 0
    // Predicated region
    $region2: #{rnn2_forward.1} parent=1 // pred_check
      _
    $region3: #{rnn2_forward.1} parent=1 // pred_check_branch
      %12 = sbr.rel (0) target = $region5
    $region4: #{rnn2_forward.1} parent=1 // pred_region
      %s14 = ssub.s32 128, 128
      %15 = vsyncadd [#allocation3], %s14
      %s17 = sshll.u32 [#allocation2], 4
      %s18 = int_to_ptr.vmem [resolvable:$true] %s17
      %20 = dma.hbm_to_vmem [thread:$0]  %s0, 128, %s18, [#allocation3]
    $region5: #{rnn2_forward.1} parent=1 // pred_fallthru
      _
    // Predicated region
    $region6: #{rnn2_forward.1} parent=1 // pred_check
      _
    $region7: #{rnn2_forward.1} parent=1 // pred_check_branch
      %22 = sbr.rel (0) target = $region9
    $region8: #{rnn2_forward.1} parent=1 // pred_region
      %s24 = ssub.s32 5120, 5120
      %25 = vsyncadd [#allocation6], %s24
      %s26 = sshll.u32 [#allocation5], 4
      %s27 = int_to_ptr.vmem [resolvable:$true] %s26
      %32 = dma.hbm_to_vmem [thread:$0]  %s1, 5120, %s27, [#allocation6], 64, 64, 4
    $region9: #{rnn2_forward.1} parent=1 // pred_fallthru
      _
    // Predicated region
    $region10: #{rnn2_forward.1} parent=1 // pred_check
      _
    $region11: #{rnn2_forward.1} parent=1 // pred_check_branch
      %34 = sbr.rel (0) target = $region13
    $region12: #{rnn2_forward.1} parent=1 // pred_region
      %s36 = ssub.s32 128, 128
      %37 = vsyncadd [#allocation6], %s36
      %s39 = sshll.u32 [#allocation7], 4
      %s40 = int_to_ptr.vmem [resolvable:$true] %s39
      %42 = dma.hbm_to_vmem [thread:$0]  %s2, 128, %s40, [#allocation6]
    $region13: #{rnn2_forward.1} parent=1 // pred_fallthru
      _
    // Predicated region
    $region14: #{rnn2_forward.1} parent=1 // pred_check
      _
    $region15: #{rnn2_forward.1} parent=1 // pred_check_branch
      %44 = sbr.rel (0) target = $region17
    $region16: #{rnn2_forward.1} parent=1 // pred_region
      %45 = dma.done [#allocation3], 128
    $region17: #{rnn2_forward.1} parent=1 // pred_fallthru
      _
    // Predicated region
    $region18: #{rnn2_forward.1} parent=1 // pred_check
      _
    $region19: #{rnn2_forward.1} parent=1 // pred_check_branch
      %47 = sbr.rel (0) target = $region21
    $region20: #{rnn2_forward.1} parent=1 // pred_region
      %48 = dma.done [#allocation6], 5120
    $region21: #{rnn2_forward.1} parent=1 // pred_fallthru
      _
    // Predicated region
    $region22: #{rnn2_forward.1} parent=1 // pred_check
      _
    $region23: #{rnn2_forward.1} parent=1 // pred_check_branch
      %50 = sbr.rel (0) target = $region25
    $region24: #{rnn2_forward.1} parent=1 // pred_region
      %51 = dma.done [#allocation6], 128
    $region25: #{rnn2_forward.1} parent=1 // pred_fallthru
      _
    %v53 = vld [vmem:[#allocation2] sm:$0xff]
    %v54 = vld [vmem:[#allocation5] sm:$0xf]
    %v55 = vld [vmem:[#allocation5 + $0x4] sm:$0xf]
    %v56 = vld [vmem:[#allocation5 + $0x8] sm:$0xf]
    %v57 = vld [vmem:[#allocation5 + $0xc] sm:$0xf]
    %v58 = vld [vmem:[#allocation7] sm:$0x1]
    %v59 = vpack.c.bf16 %v53, %v53
    %v60 = vlaneseq
    %v61 = vshrl.u32 %v60, 7
    %v62 = vsub.s32 0, %v61
    %v63 = vrot.slane %v58, %v62
    %v68 = vunpack.c.l.b16 %v54
    %v69 = vunpack.c.l.b16 %v55
    %v70 = vunpack.c.l.b16 %v56
    %v71 = vunpack.c.l.b16 %v57
    %v72 = vpack.c.b16 %v69, %v68
    %v73 = vpack.c.b16 %v71, %v70
    %vm76 = vcmask 261120
    %v78 = vsel %vm76, %v59, 0
    %80 = vmatprep.subr.bf16.mxu0 0
    %81 = vmatpush1.bf16.msra.mxu0 0
    %82 = vmatprep.subr.bf16.mxu0 0
    %83 = vmatpush1.bf16.msra.mxu0 0
    %84 = vmatprep.subr.bf16.mxu0 0
    %85 = vmatpush1.bf16.msra.mxu0 0
    %86 = vmatprep.subr.bf16.mxu0 0
    %87 = vmatpush1.bf16.msra.mxu0 0
    %88 = vmatprep.subr.bf16.mxu0 0
    %89 = vmatpush1.bf16.msra.mxu0 0
    %90 = vmatprep.subr.bf16.mxu0 0
    %91 = vmatpush1.bf16.msra.mxu0 0
    %92 = vmatprep.subr.bf16.mxu0 0
    %93 = vmatpush1.bf16.msra.mxu0 %v73
    %94 = vmatprep.subr.bf16.mxu0 0
    %95 = vmatpush1.bf16.msra.mxu0 %v72
    %96 = vmatprep.subr.bf16.mxu0 0
    %97 = vmatpush2.bf16.msra.mxu0 0
    %98 = vmatprep.subr.bf16.mxu0 0
    %99 = vmatpush2.bf16.msra.mxu0 0
    %100 = vmatprep.subr.bf16.mxu0 0
    %101 = vmatpush2.bf16.msra.mxu0 0
    %102 = vmatprep.subr.bf16.mxu0 0
    %103 = vmatpush2.bf16.msra.mxu0 0
    %104 = vmatprep.subr.bf16.mxu0 0
    %105 = vmatpush2.bf16.msra.mxu0 0
    %106 = vmatprep.subr.bf16.mxu0 0
    %107 = vmatpush2.bf16.msra.mxu0 0
    %108 = vmatprep.subr.bf16.mxu0 0
    %109 = vmatpush2.bf16.msra.mxu0 0
    %110 = vmatprep.subr.bf16.mxu0 0
    %111 = vmatpush2.bf16.msra.mxu0 0
    %112 = vmatprep.mubr.bf16.mxu0 0
    %113 = vmatmul.mubr.bf16.gmra.mxu0 %v78
    %v114 = vpop.f32.mrf.mxu0
    %v115 = vadd.f32 %v63, %v114
    %v116 = vpop.f32.mrf.mxu0
    %v117 = vpop.f32.mrf.mxu0
    %v118 = vpop.f32.mrf.mxu0
    %119 = vdwg.mxu0
    %v120 = vtanh.pop %v115
    %v121 = vld [vmem:[#allocation5 + $0x40] sm:$0xf]
    %v122 = vld [vmem:[#allocation5 + $0x44] sm:$0xf]
    %v123 = vld [vmem:[#allocation5 + $0x48] sm:$0xf]
    %v124 = vld [vmem:[#allocation5 + $0x4c] sm:$0xf]
    %v125 = vld [vmem:[#allocation5 + $0x50] sm:$0xf]
    %v126 = vld [vmem:[#allocation5 + $0x54] sm:$0xf]
    %v127 = vld [vmem:[#allocation5 + $0x58] sm:$0xf]
    %v128 = vld [vmem:[#allocation5 + $0x5c] sm:$0xf]
    %v129 = vld [vmem:[#allocation5 + $0x60] sm:$0xf]
    %v130 = vld [vmem:[#allocation5 + $0x64] sm:$0xf]
    %v131 = vld [vmem:[#allocation5 + $0x68] sm:$0xf]
    %v132 = vld [vmem:[#allocation5 + $0x6c] sm:$0xf]
    %v133 = vld [vmem:[#allocation5 + $0x70] sm:$0xf]
    %v134 = vld [vmem:[#allocation5 + $0x74] sm:$0xf]
    %v135 = vld [vmem:[#allocation5 + $0x78] sm:$0xf]
    %v136 = vld [vmem:[#allocation5 + $0x7c] sm:$0xf]
    %v137 = vld [vmem:[#allocation7 + $0x1] sm:$0x1]
    %v138 = vpack.c.bf16 %v120, %v120
    %v139 = vlaneseq
    %v140 = vshrl.u32 %v139, 7
    %v141 = vsub.s32 0, %v140
    %v142 = vrot.slane %v137, %v141
    %v159 = vunpack.c.l.b16 %v121
    %v160 = vunpack.c.l.b16 %v122
    %v161 = vunpack.c.l.b16 %v123
    %v162 = vunpack.c.l.b16 %v124
    %v163 = vunpack.c.l.b16 %v125
    %v164 = vunpack.c.l.b16 %v126
    %v165 = vunpack.c.l.b16 %v127
    %v166 = vunpack.c.l.b16 %v128
    %v167 = vunpack.c.l.b16 %v129
    %v168 = vunpack.c.l.b16 %v130
    %v169 = vunpack.c.l.b16 %v131
    %v170 = vunpack.c.l.b16 %v132
    %v171 = vunpack.c.l.b16 %v133
    %v172 = vunpack.c.l.b16 %v134
    %v173 = vunpack.c.l.b16 %v135
    %v174 = vunpack.c.l.b16 %v136
    %v175 = vpack.c.b16 %v160, %v159
    %v176 = vpack.c.b16 %v162, %v161
    %v177 = vpack.c.b16 %v164, %v163
    %v178 = vpack.c.b16 %v166, %v165
    %v179 = vpack.c.b16 %v168, %v167
    %v180 = vpack.c.b16 %v170, %v169
    %v181 = vpack.c.b16 %v172, %v171
    %v182 = vpack.c.b16 %v174, %v173
    %191 = vmatprep.subr.bf16.mxu0 0
    %192 = vmatpush1.bf16.msra.mxu0 %v182
    %193 = vmatprep.subr.bf16.mxu0 0
    %194 = vmatpush1.bf16.msra.mxu0 %v181
    %195 = vmatprep.subr.bf16.mxu0 0
    %196 = vmatpush1.bf16.msra.mxu0 %v180
    %197 = vmatprep.subr.bf16.mxu0 0
    %198 = vmatpush1.bf16.msra.mxu0 %v179
    %199 = vmatprep.subr.bf16.mxu0 0
    %200 = vmatpush1.bf16.msra.mxu0 %v178
    %201 = vmatprep.subr.bf16.mxu0 0
    %202 = vmatpush1.bf16.msra.mxu0 %v177
    %203 = vmatprep.subr.bf16.mxu0 0
    %204 = vmatpush1.bf16.msra.mxu0 %v176
    %205 = vmatprep.subr.bf16.mxu0 0
    %206 = vmatpush1.bf16.msra.mxu0 %v175
    %207 = vmatprep.subr.bf16.mxu0 0
    %208 = vmatpush2.bf16.msra.mxu0 0
    %209 = vmatprep.subr.bf16.mxu0 0
    %210 = vmatpush2.bf16.msra.mxu0 0
    %211 = vmatprep.subr.bf16.mxu0 0
    %212 = vmatpush2.bf16.msra.mxu0 0
    %213 = vmatprep.subr.bf16.mxu0 0
    %214 = vmatpush2.bf16.msra.mxu0 0
    %215 = vmatprep.subr.bf16.mxu0 0
    %216 = vmatpush2.bf16.msra.mxu0 0
    %217 = vmatprep.subr.bf16.mxu0 0
    %218 = vmatpush2.bf16.msra.mxu0 0
    %219 = vmatprep.subr.bf16.mxu0 0
    %220 = vmatpush2.bf16.msra.mxu0 0
    %221 = vmatprep.subr.bf16.mxu0 0
    %222 = vmatpush2.bf16.msra.mxu0 0
    %223 = vmatprep.mubr.bf16.mxu0 0
    %224 = vmatmul.mubr.bf16.gmra.mxu0 %v138
    %v225 = vpop.f32.mrf.mxu0
    %v226 = vadd.f32 %v142, %v225
    %v227 = vpop.f32.mrf.mxu0
    %v228 = vpop.f32.mrf.mxu0
    %v229 = vpop.f32.mrf.mxu0
    %230 = vdwg.mxu0
    %v231 = vtanh.pop %v226
    %v232 = vld [vmem:[#allocation5 + $0x80] sm:$0xf]
    %v233 = vld [vmem:[#allocation5 + $0x84] sm:$0xf]
    %v234 = vld [vmem:[#allocation5 + $0x88] sm:$0xf]
    %v235 = vld [vmem:[#allocation5 + $0x8c] sm:$0xf]
    %v236 = vld [vmem:[#allocation5 + $0x90] sm:$0xf]
    %v237 = vld [vmem:[#allocation5 + $0x94] sm:$0xf]
    %v238 = vld [vmem:[#allocation5 + $0x98] sm:$0xf]
    %v239 = vld [vmem:[#allocation5 + $0x9c] sm:$0xf]
    %v240 = vld [vmem:[#allocation5 + $0xa0] sm:$0xf]
    %v241 = vld [vmem:[#allocation5 + $0xa4] sm:$0xf]
    %v242 = vld [vmem:[#allocation5 + $0xa8] sm:$0xf]
    %v243 = vld [vmem:[#allocation5 + $0xac] sm:$0xf]
    %v244 = vld [vmem:[#allocation5 + $0xb0] sm:$0xf]
    %v245 = vld [vmem:[#allocation5 + $0xb4] sm:$0xf]
    %v246 = vld [vmem:[#allocation5 + $0xb8] sm:$0xf]
    %v247 = vld [vmem:[#allocation5 + $0xbc] sm:$0xf]
    %v248 = vld [vmem:[#allocation7 + $0x2] sm:$0x1]
    %v249 = vpack.c.bf16 %v231, %v231
    %v250 = vlaneseq
    %v251 = vshrl.u32 %v250, 7
    %v252 = vsub.s32 0, %v251
    %v253 = vrot.slane %v248, %v252
    %v270 = vunpack.c.l.b16 %v232
    %v271 = vunpack.c.l.b16 %v233
    %v272 = vunpack.c.l.b16 %v234
    %v273 = vunpack.c.l.b16 %v235
    %v274 = vunpack.c.l.b16 %v236
    %v275 = vunpack.c.l.b16 %v237
    %v276 = vunpack.c.l.b16 %v238
    %v277 = vunpack.c.l.b16 %v239
    %v278 = vunpack.c.l.b16 %v240
    %v279 = vunpack.c.l.b16 %v241
    %v280 = vunpack.c.l.b16 %v242
    %v281 = vunpack.c.l.b16 %v243
    %v282 = vunpack.c.l.b16 %v244
    %v283 = vunpack.c.l.b16 %v245
    %v284 = vunpack.c.l.b16 %v246
    %v285 = vunpack.c.l.b16 %v247
    %v286 = vpack.c.b16 %v271, %v270
    %v287 = vpack.c.b16 %v273, %v272
    %v288 = vpack.c.b16 %v275, %v274
    %v289 = vpack.c.b16 %v277, %v276
    %v290 = vpack.c.b16 %v279, %v278
    %v291 = vpack.c.b16 %v281, %v280
    %v292 = vpack.c.b16 %v283, %v282
    %v293 = vpack.c.b16 %v285, %v284
    %302 = vmatprep.subr.bf16.mxu0 0
    %303 = vmatpush1.bf16.msra.mxu0 %v293
    %304 = vmatprep.subr.bf16.mxu0 0
    %305 = vmatpush1.bf16.msra.mxu0 %v292
    %306 = vmatprep.subr.bf16.mxu0 0
    %307 = vmatpush1.bf16.msra.mxu0 %v291
    %308 = vmatprep.subr.bf16.mxu0 0
    %309 = vmatpush1.bf16.msra.mxu0 %v290
    %310 = vmatprep.subr.bf16.mxu0 0
    %311 = vmatpush1.bf16.msra.mxu0 %v289
    %312 = vmatprep.subr.bf16.mxu0 0
    %313 = vmatpush1.bf16.msra.mxu0 %v288
    %314 = vmatprep.subr.bf16.mxu0 0
    %315 = vmatpush1.bf16.msra.mxu0 %v287
    %316 = vmatprep.subr.bf16.mxu0 0
    %317 = vmatpush1.bf16.msra.mxu0 %v286
    %318 = vmatprep.subr.bf16.mxu0 0
    %319 = vmatpush2.bf16.msra.mxu0 0
    %320 = vmatprep.subr.bf16.mxu0 0
    %321 = vmatpush2.bf16.msra.mxu0 0
    %322 = vmatprep.subr.bf16.mxu0 0
    %323 = vmatpush2.bf16.msra.mxu0 0
    %324 = vmatprep.subr.bf16.mxu0 0
    %325 = vmatpush2.bf16.msra.mxu0 0
    %326 = vmatprep.subr.bf16.mxu0 0
    %327 = vmatpush2.bf16.msra.mxu0 0
    %328 = vmatprep.subr.bf16.mxu0 0
    %329 = vmatpush2.bf16.msra.mxu0 0
    %330 = vmatprep.subr.bf16.mxu0 0
    %331 = vmatpush2.bf16.msra.mxu0 0
    %332 = vmatprep.subr.bf16.mxu0 0
    %333 = vmatpush2.bf16.msra.mxu0 0
    %334 = vmatprep.mubr.bf16.mxu0 0
    %335 = vmatmul.mubr.bf16.gmra.mxu0 %v249
    %v336 = vpop.f32.mrf.mxu0
    %v337 = vadd.f32 %v253, %v336
    %v338 = vpop.f32.mrf.mxu0
    %v339 = vpop.f32.mrf.mxu0
    %v340 = vpop.f32.mrf.mxu0
    %341 = vdwg.mxu0
    %v342 = vtanh.pop %v337
    %v343 = vld [vmem:[#allocation5 + $0xc0] sm:$0xf]
    %v344 = vld [vmem:[#allocation5 + $0xc4] sm:$0xf]
    %v345 = vld [vmem:[#allocation5 + $0xc8] sm:$0xf]
    %v346 = vld [vmem:[#allocation5 + $0xcc] sm:$0xf]
    %v347 = vld [vmem:[#allocation5 + $0xd0] sm:$0xf]
    %v348 = vld [vmem:[#allocation5 + $0xd4] sm:$0xf]
    %v349 = vld [vmem:[#allocation5 + $0xd8] sm:$0xf]
    %v350 = vld [vmem:[#allocation5 + $0xdc] sm:$0xf]
    %v351 = vld [vmem:[#allocation5 + $0xe0] sm:$0xf]
    %v352 = vld [vmem:[#allocation5 + $0xe4] sm:$0xf]
    %v353 = vld [vmem:[#allocation5 + $0xe8] sm:$0xf]
    %v354 = vld [vmem:[#allocation5 + $0xec] sm:$0xf]
    %v355 = vld [vmem:[#allocation5 + $0xf0] sm:$0xf]
    %v356 = vld [vmem:[#allocation5 + $0xf4] sm:$0xf]
    %v357 = vld [vmem:[#allocation5 + $0xf8] sm:$0xf]
    %v358 = vld [vmem:[#allocation5 + $0xfc] sm:$0xf]
    %v359 = vld [vmem:[#allocation7 + $0x3] sm:$0x1]
    %v360 = vpack.c.bf16 %v342, %v342
    %v361 = vlaneseq
    %v362 = vshrl.u32 %v361, 7
    %v363 = vsub.s32 0, %v362
    %v364 = vrot.slane %v359, %v363
    %v381 = vunpack.c.l.b16 %v343
    %v382 = vunpack.c.l.b16 %v344
    %v383 = vunpack.c.l.b16 %v345
    %v384 = vunpack.c.l.b16 %v346
    %v385 = vunpack.c.l.b16 %v347
    %v386 = vunpack.c.l.b16 %v348
    %v387 = vunpack.c.l.b16 %v349
    %v388 = vunpack.c.l.b16 %v350
    %v389 = vunpack.c.l.b16 %v351
    %v390 = vunpack.c.l.b16 %v352
    %v391 = vunpack.c.l.b16 %v353
    %v392 = vunpack.c.l.b16 %v354
    %v393 = vunpack.c.l.b16 %v355
    %v394 = vunpack.c.l.b16 %v356
    %v395 = vunpack.c.l.b16 %v357
    %v396 = vunpack.c.l.b16 %v358
    %v397 = vpack.c.b16 %v382, %v381
    %v398 = vpack.c.b16 %v384, %v383
    %v399 = vpack.c.b16 %v386, %v385
    %v400 = vpack.c.b16 %v388, %v387
    %v401 = vpack.c.b16 %v390, %v389
    %v402 = vpack.c.b16 %v392, %v391
    %v403 = vpack.c.b16 %v394, %v393
    %v404 = vpack.c.b16 %v396, %v395
    %413 = vmatprep.subr.bf16.mxu0 0
    %414 = vmatpush1.bf16.msra.mxu0 %v404
    %415 = vmatprep.subr.bf16.mxu0 0
    %416 = vmatpush1.bf16.msra.mxu0 %v403
    %417 = vmatprep.subr.bf16.mxu0 0
    %418 = vmatpush1.bf16.msra.mxu0 %v402
    %419 = vmatprep.subr.bf16.mxu0 0
    %420 = vmatpush1.bf16.msra.mxu0 %v401
    %421 = vmatprep.subr.bf16.mxu0 0
    %422 = vmatpush1.bf16.msra.mxu0 %v400
    %423 = vmatprep.subr.bf16.mxu0 0
    %424 = vmatpush1.bf16.msra.mxu0 %v399
    %425 = vmatprep.subr.bf16.mxu0 0
    %426 = vmatpush1.bf16.msra.mxu0 %v398
    %427 = vmatprep.subr.bf16.mxu0 0
    %428 = vmatpush1.bf16.msra.mxu0 %v397
    %429 = vmatprep.subr.bf16.mxu0 0
    %430 = vmatpush2.bf16.msra.mxu0 0
    %431 = vmatprep.subr.bf16.mxu0 0
    %432 = vmatpush2.bf16.msra.mxu0 0
    %433 = vmatprep.subr.bf16.mxu0 0
    %434 = vmatpush2.bf16.msra.mxu0 0
    %435 = vmatprep.subr.bf16.mxu0 0
    %436 = vmatpush2.bf16.msra.mxu0 0
    %437 = vmatprep.subr.bf16.mxu0 0
    %438 = vmatpush2.bf16.msra.mxu0 0
    %439 = vmatprep.subr.bf16.mxu0 0
    %440 = vmatpush2.bf16.msra.mxu0 0
    %441 = vmatprep.subr.bf16.mxu0 0
    %442 = vmatpush2.bf16.msra.mxu0 0
    %443 = vmatprep.subr.bf16.mxu0 0
    %444 = vmatpush2.bf16.msra.mxu0 0
    %445 = vmatprep.mubr.bf16.mxu0 0
    %446 = vmatmul.mubr.bf16.gmra.mxu0 %v360
    %v447 = vpop.f32.mrf.mxu0
    %v448 = vadd.f32 %v364, %v447
    %v449 = vpop.f32.mrf.mxu0
    %v450 = vpop.f32.mrf.mxu0
    %v451 = vpop.f32.mrf.mxu0
    %452 = vdwg.mxu0
    %v453 = vtanh.pop %v448
    %v454 = vld [vmem:[#allocation5 + $0x100] sm:$0xf]
    %v455 = vld [vmem:[#allocation5 + $0x104] sm:$0xf]
    %v456 = vld [vmem:[#allocation5 + $0x108] sm:$0xf]
    %v457 = vld [vmem:[#allocation5 + $0x10c] sm:$0xf]
    %v458 = vld [vmem:[#allocation5 + $0x110] sm:$0xf]
    %v459 = vld [vmem:[#allocation5 + $0x114] sm:$0xf]
    %v460 = vld [vmem:[#allocation5 + $0x118] sm:$0xf]
    %v461 = vld [vmem:[#allocation5 + $0x11c] sm:$0xf]
    %v462 = vld [vmem:[#allocation5 + $0x120] sm:$0xf]
    %v463 = vld [vmem:[#allocation5 + $0x124] sm:$0xf]
    %v464 = vld [vmem:[#allocation5 + $0x128] sm:$0xf]
    %v465 = vld [vmem:[#allocation5 + $0x12c] sm:$0xf]
    %v466 = vld [vmem:[#allocation5 + $0x130] sm:$0xf]
    %v467 = vld [vmem:[#allocation5 + $0x134] sm:$0xf]
    %v468 = vld [vmem:[#allocation5 + $0x138] sm:$0xf]
    %v469 = vld [vmem:[#allocation5 + $0x13c] sm:$0xf]
    %v470 = vld [vmem:[#allocation7 + $0x4] sm:$0x1]
    %v471 = vpack.c.bf16 %v453, %v453
    %v472 = vlaneseq
    %v473 = vshrl.u32 %v472, 7
    %v474 = vsub.s32 0, %v473
    %v475 = vrot.slane %v470, %v474
    %v492 = vunpack.c.l.b16 %v454
    %v493 = vunpack.c.l.b16 %v455
    %v494 = vunpack.c.l.b16 %v456
    %v495 = vunpack.c.l.b16 %v457
    %v496 = vunpack.c.l.b16 %v458
    %v497 = vunpack.c.l.b16 %v459
    %v498 = vunpack.c.l.b16 %v460
    %v499 = vunpack.c.l.b16 %v461
    %v500 = vunpack.c.l.b16 %v462
    %v501 = vunpack.c.l.b16 %v463
    %v502 = vunpack.c.l.b16 %v464
    %v503 = vunpack.c.l.b16 %v465
    %v504 = vunpack.c.l.b16 %v466
    %v505 = vunpack.c.l.b16 %v467
    %v506 = vunpack.c.l.b16 %v468
    %v507 = vunpack.c.l.b16 %v469
    %v508 = vpack.c.b16 %v493, %v492
    %v509 = vpack.c.b16 %v495, %v494
    %v510 = vpack.c.b16 %v497, %v496
    %v511 = vpack.c.b16 %v499, %v498
    %v512 = vpack.c.b16 %v501, %v500
    %v513 = vpack.c.b16 %v503, %v502
    %v514 = vpack.c.b16 %v505, %v504
    %v515 = vpack.c.b16 %v507, %v506
    %524 = vmatprep.subr.bf16.mxu0 0
    %525 = vmatpush1.bf16.msra.mxu0 %v515
    %526 = vmatprep.subr.bf16.mxu0 0
    %527 = vmatpush1.bf16.msra.mxu0 %v514
    %528 = vmatprep.subr.bf16.mxu0 0
    %529 = vmatpush1.bf16.msra.mxu0 %v513
    %530 = vmatprep.subr.bf16.mxu0 0
    %531 = vmatpush1.bf16.msra.mxu0 %v512
    %532 = vmatprep.subr.bf16.mxu0 0
    %533 = vmatpush1.bf16.msra.mxu0 %v511
    %534 = vmatprep.subr.bf16.mxu0 0
    %535 = vmatpush1.bf16.msra.mxu0 %v510
    %536 = vmatprep.subr.bf16.mxu0 0
    %537 = vmatpush1.bf16.msra.mxu0 %v509
    %538 = vmatprep.subr.bf16.mxu0 0
    %539 = vmatpush1.bf16.msra.mxu0 %v508
    %540 = vmatprep.subr.bf16.mxu0 0
    %541 = vmatpush2.bf16.msra.mxu0 0
    %542 = vmatprep.subr.bf16.mxu0 0
    %543 = vmatpush2.bf16.msra.mxu0 0
    %544 = vmatprep.subr.bf16.mxu0 0
    %545 = vmatpush2.bf16.msra.mxu0 0
    %546 = vmatprep.subr.bf16.mxu0 0
    %547 = vmatpush2.bf16.msra.mxu0 0
    %548 = vmatprep.subr.bf16.mxu0 0
    %549 = vmatpush2.bf16.msra.mxu0 0
    %550 = vmatprep.subr.bf16.mxu0 0
    %551 = vmatpush2.bf16.msra.mxu0 0
    %552 = vmatprep.subr.bf16.mxu0 0
    %553 = vmatpush2.bf16.msra.mxu0 0
    %554 = vmatprep.subr.bf16.mxu0 0
    %555 = vmatpush2.bf16.msra.mxu0 0
    %556 = vmatprep.mubr.bf16.mxu0 0
    %557 = vmatmul.mubr.bf16.gmra.mxu0 %v471
    %v558 = vpop.f32.mrf.mxu0
    %v559 = vadd.f32 %v475, %v558
    %v560 = vpop.f32.mrf.mxu0
    %v561 = vpop.f32.mrf.mxu0
    %v562 = vpop.f32.mrf.mxu0
    %563 = vdwg.mxu0
    %564 = vmax.xlane.f32.xlu0 %v559
    %v565 = vpop.xlane.xlu0 %564
    %v566 = vsub.f32 %v559, %v565
    %v567 = vmul.f32 %v566, 1.442695
    %v568 = vpow.pop %v567
    %569 = vadd.xlane.f32.xlu0 %v568
    %v570 = vpop.xlane.xlu0 %569
    %v571 = vrcp.pop %v570
    %v572 = vmul.f32 %v568, %v571
    %vm573 = vcmask 130048
    %574 = vst.msk [vmem:[#allocation8] sm:$0xff] %vm573, %v572
    // Predicated region
    $region26: #{rnn2_forward.1} parent=1 // pred_check
      _
    $region27: #{rnn2_forward.1} parent=1 // pred_check_branch
      %576 = sbr.rel (0) target = $region29
    $region28: #{rnn2_forward.1} parent=1 // pred_region
      %s578 = ssub.s32 128, 128
      %579 = vsyncadd [#allocation4], %s578
      %s581 = sshll.u32 [#allocation8], 4
      %s582 = int_to_ptr.vmem [resolvable:$true] %s581
      %584 = dma.vmem_to_hbm [thread:$0]  %s582, 128, %s3, [#allocation4]
    $region29: #{rnn2_forward.1} parent=1 // pred_fallthru
      _
    // Predicated region
    $region30: #{rnn2_forward.1} parent=1 // pred_check
      _
    $region31: #{rnn2_forward.1} parent=1 // pred_check_branch
      %586 = sbr.rel (0) target = $region33
    $region32: #{rnn2_forward.1} parent=1 // pred_region
      %587 = dma.done [#allocation4], 128
    $region33: #{rnn2_forward.1} parent=1 // pred_fallthru
      _
    %588 = vsyncpa [#allocation3], 1
    %589 = vsyncpa [#allocation6], 1
    %590 = vsyncpa [#allocation4], 1

</llo_original>
